<compile_context>
chip_gen: v6e
topology: v6e:2x2x1
jax: 0.10.0
libtpu: 0.0.40
codegen_flags: <defaults>
</compile_context>

<pallas_src>
import jax
import jax.numpy as jnp
from jax.experimental import pallas as pl
from jax.experimental.pallas import tpu as pltpu


def _round_up(x, m):
    return ((x + m - 1) // m) * m


# ----------------------------------------------------------------------------
# Pallas kernel: fused block-diagonal 4-layer MLP for the three heads.
# ----------------------------------------------------------------------------
def _heads_kernel(hs_ref, w0_ref, wmid_ref, w3_ref, b_ref, out_ref):
    cdt = w0_ref.dtype                    # bf16 compute dtype for the MXU
    F = w0_ref.shape[-1]                  # fused (padded) hidden width
    out_pad = out_ref.shape[-1]           # padded output width (128)

    x = hs_ref[...]                                                   # (TM, H)

    h = jnp.dot(x, w0_ref[...], preferred_element_type=jnp.float32)   # (TM, F)
    h = jax.nn.sigmoid(h + b_ref[0:1, :F])                            # f32 VPU/EUP

    h = jnp.dot(h.astype(cdt), wmid_ref[0],
                preferred_element_type=jnp.float32)
    h = jax.nn.sigmoid(h + b_ref[1:2, :F])

    h = jnp.dot(h.astype(cdt), wmid_ref[1],
                preferred_element_type=jnp.float32)
    h = jax.nn.sigmoid(h + b_ref[2:3, :F])

    out = jnp.dot(h.astype(cdt), w3_ref[...],
                  preferred_element_type=jnp.float32)                 # (TM, OUT_PAD)
    out_ref[...] = (out + b_ref[3:4, :out_pad]).astype(out_ref.dtype)


# ----------------------------------------------------------------------------
# Host-side parameter packing into a few VMEM-friendly slabs.
# ----------------------------------------------------------------------------
def _pack_heads(ba_params, az_params, el_params, compute_dtype):
    """Pack 3 heads x 4 layers of (W, b) into fused/block-diagonal slabs."""
    heads = (ba_params, az_params, el_params)
    H = ba_params[0].shape[0]
    widths = tuple(p[0].shape[1] for p in heads)        # hidden widths (32, 96, 96)
    fused = sum(widths)                                  # 224
    F = _round_up(max(fused, 128), 128)                  # 256
    outs = tuple(p[6].shape[1] for p in heads)           # (num_deg+1, 1, 1)
    out_dim = sum(outs)                                  # 12
    out_pad = _round_up(max(out_dim, 128), 128)          # 128
    bias_w = max(F, out_pad)

    w0 = jnp.zeros((H, F), jnp.float32)
    wmid = jnp.zeros((2, F, F), jnp.float32)
    w3 = jnp.zeros((F, out_pad), jnp.float32)
    b = jnp.zeros((4, bias_w), jnp.float32)

    # Layer 0: shared input x -> concatenate output columns.
    col = 0
    for p, w_ in zip(heads, widths):
        w0 = w0.at[:, col:col + w_].set(p[0])
        b = b.at[0, col:col + w_].set(p[1].reshape(-1))
        col += w_

    # Layers 1, 2: block diagonal (square per-head blocks).
    for li, layer in enumerate((1, 2)):
        off = 0
        for p, w_ in zip(heads, widths):
            wl = p[2 * layer]
            bl = p[2 * layer + 1].reshape(-1)
            wmid = wmid.at[li, off:off + wl.shape[0], off:off + wl.shape[1]].set(wl)
            b = b.at[layer, off:off + wl.shape[1]].set(bl)
            off += w_

    # Layer 3: stacked rows, concatenated output columns (no activation).
    roff, coff = 0, 0
    for p, w_, o_ in zip(heads, widths, outs):
        w3 = w3.at[roff:roff + w_, coff:coff + o_].set(p[6])
        b = b.at[3, coff:coff + o_].set(p[7].reshape(-1))
        roff += w_
        coff += o_

    return (w0.astype(compute_dtype), wmid.astype(compute_dtype),
            w3.astype(compute_dtype), b, F, out_pad, outs)


# ----------------------------------------------------------------------------
# Wrapper: pad rows, run the fused kernel, split the lane-dense output.
# ----------------------------------------------------------------------------
def detection_heads_pallas(hs, ba_params, az_params, el_params,
                           compute_dtype=jnp.bfloat16):
    """hs: (B, Q, hidden) float32.  Returns (pred_ba, pred_az, pred_el)."""
    B, Q, H = hs.shape
    M = B * Q

    w0, wmid, w3, b, F, out_pad, outs = _pack_heads(
        ba_params, az_params, el_params, compute_dtype)

    # Row tiling: one block for small M; 256-row blocks (parallel axis) if M grows.
    TM = min(256, _round_up(M, 8))
    M_pad = _round_up(M, TM)
    hs_flat = hs.reshape(M, H).astype(compute_dtype)
    if M_pad != M:
        hs_flat = jnp.pad(hs_flat, ((0, M_pad - M), (0, 0)))
    grid = (M_pad // TM,)

    itemsize = jnp.dtype(compute_dtype).itemsize
    flops = 2 * M_pad * (H * F + 2 * F * F + F * out_pad)
    transcendentals = 3 * M_pad * F
    bytes_accessed = (hs_flat.size * itemsize
                      + (w0.size + wmid.size + w3.size) * itemsize
                      + b.size * 4
                      + M_pad * out_pad * 4)

    out = pl.pallas_call(
        _heads_kernel,
        out_shape=jax.ShapeDtypeStruct((M_pad, out_pad), jnp.float32),
        grid_spec=pltpu.PrefetchScalarGridSpec(
            num_scalar_prefetch=0,
            grid=grid,
            in_specs=[
                pl.BlockSpec((TM, H), lambda i: (i, 0)),          # hs rows
                pl.BlockSpec((H, F), lambda i: (0, 0)),           # fused layer-0 W
                pl.BlockSpec((2, F, F), lambda i: (0, 0, 0)),     # block-diag layers 1-2
                pl.BlockSpec((F, out_pad), lambda i: (0, 0)),     # stacked layer-3 W
                pl.BlockSpec((4, b.shape[1]), lambda i: (0, 0)),  # bias slab
            ],
            out_specs=pl.BlockSpec((TM, out_pad), lambda i: (i, 0)),
        ),
        compiler_params=pltpu.CompilerParams(
            dimension_semantics=("parallel",)),
        cost_estimate=pl.CostEstimate(
            flops=flops,
            transcendentals=transcendentals,
            bytes_accessed=bytes_accessed),
    )(hs_flat, w0, wmid, w3, b)

    out = out[:M]
    o_ba, o_az, o_el = outs
    pred_ba = out[:, :o_ba].reshape(B, Q, o_ba)
    pred_az = out[:, o_ba:o_ba + o_az].reshape(B, Q, o_az)
    pred_el = out[:, o_ba + o_az:o_ba + o_az + o_el].reshape(B, Q, o_el)
    return pred_ba, pred_az, pred_el


# ----------------------------------------------------------------------------
# Deterministic parameter construction (PyTorch-Linear-style uniform init).
# Weights stored as (in, out) so y = x @ W + b (transposed vs torch.nn.Linear).
# ----------------------------------------------------------------------------
def _linear_params(key, fan_in, fan_out):
    kw, kb = jax.random.split(key)
    bound = 1.0 / jnp.sqrt(fan_in)
    w = jax.random.uniform(kw, (fan_in, fan_out), jnp.float32, -bound, bound)
    b = jax.random.uniform(kb, (1, fan_out), jnp.float32, -bound, bound)
    return w, b


def make_mlp_params(key, input_dim, hidden_dim, output_dim, num_layers):
    dims_in = [input_dim] + [hidden_dim] * (num_layers - 1)
    dims_out = [hidden_dim] * (num_layers - 1) + [output_dim]
    keys = jax.random.split(key, num_layers)
    params = []
    for k, din, dout in zip(keys, dims_in, dims_out):
        w, b = _linear_params(k, din, dout)
        params += [w, b]
    return params


# ----------------------------------------------------------------------------
# Plain-JAX stand-ins for injected dependencies (backbone / pos / transformer).
# ----------------------------------------------------------------------------
# TODO(synk): backbone, transformer and build_position_encoding are externally
# injected modules with no definition in the reference; replaced by simple
# deterministic stand-ins so the Detection_azel head kernel can be exercised.
def backbone_standin(x, w_proj):
    # x: (B, C, H, W) NCHW -> 4x4 average patches -> tokens (B, S, d_model)
    B, C, H, W = x.shape
    p = 4
    xt = x.reshape(B, C, H // p, p, W // p, p).mean(axis=(3, 5))  # (B,C,H/p,W/p)
    tokens = xt.reshape(B, C, -1).transpose(0, 2, 1)              # (B, S, C)
    return tokens @ w_proj                                        # (B, S, d)


def transformer_standin(tgt, memory, pos):
    # Single cross-attention step: queries attend over (memory + pos).
    d = tgt.shape[-1]
    mem = memory + pos
    logits = jnp.einsum('bqd,bsd->bqs', tgt, mem) / jnp.sqrt(jnp.float32(d))
    attn = jax.nn.softmax(logits, axis=-1)
    return tgt + jnp.einsum('bqs,bsd->bqd', attn, mem)            # (B, Q, d)


# ----------------------------------------------------------------------------
# Full Detection_azel forward.
# ----------------------------------------------------------------------------
def detection_azel_forward(inputs, params):
    features = backbone_standin(inputs, params['backbone_proj'])   # (B, S, d)
    pos = params['pos_embed'][None, : features.shape[1], :]        # (1, S, d)
    B = inputs.shape[0]
    tgt = jnp.broadcast_to(
        params['query_embed'][None], (B,) + params['query_embed'].shape)
    hs = transformer_standin(tgt, features, pos)                   # (B, Q, d)

    pred_ba, pred_az, pred_el = detection_heads_pallas(
        hs, params['ba'], params['az'], params['el'])
    return {'pred_ba': pred_ba, 'pred_az': pred_az, 'pred_el': pred_el}


# ----------------------------------------------------------------------------
# Plain-JAX reference MLP (f32) for a loose numerical check of the packing.
# ----------------------------------------------------------------------------
def _mlp_ref(x, params):
    h = x
    n = len(params) // 2
    for i in range(n):
        w, b = params[2 * i], params[2 * i + 1]
        h = h @ w + b
        if i < n - 1:
            h = jax.nn.sigmoid(h)
    return h


if __name__ == "__main__":
    key = jax.random.PRNGKey(0)
    B, C, Himg, Wimg = 2, 4, 16, 16
    hidden_dim = 32          # transformer.d_model
    num_queries = 8
    num_deg = 9              # -> ba output dim = num_deg + 1 = 10

    keys = jax.random.split(key, 8)
    x = jax.random.normal(keys[0], (B, C, Himg, Wimg), jnp.float32)

    params = {
        'backbone_proj': jax.random.normal(keys[1], (C, hidden_dim), jnp.float32)
                         / jnp.sqrt(jnp.float32(C)),
        'pos_embed': 0.02 * jax.random.normal(
            keys[2], ((Himg // 4) * (Wimg // 4), hidden_dim), jnp.float32),
        'query_embed': jax.random.normal(
            keys[3], (num_queries, hidden_dim), jnp.float32),
        'ba': make_mlp_params(keys[4], hidden_dim, hidden_dim, num_deg + 1, 4),
        'az': make_mlp_params(keys[5], hidden_dim, hidden_dim * 3, 1, 4),
        'el': make_mlp_params(keys[6], hidden_dim, hidden_dim * 3, 1, 4),
    }

    out = jax.jit(detection_azel_forward)(x, params)
    jax.block_until_ready(out)

    assert out['pred_ba'].shape == (B, num_queries, num_deg + 1)
    assert out['pred_az'].shape == (B, num_queries, 1)
    assert out['pred_el'].shape == (B, num_queries, 1)

    # Loose check vs f32 plain-JAX heads (kernel matmuls run in bf16/f32-acc).
    features = backbone_standin(x, params['backbone_proj'])
    pos = params['pos_embed'][None, : features.shape[1], :]
    tgt = jnp.broadcast_to(params['query_embed'][None],
                           (B, num_queries, hidden_dim))
    hs = transformer_standin(tgt, features, pos)
    ref_ba = _mlp_ref(hs, params['ba'])
    ref_az = _mlp_ref(hs, params['az'])
    ref_el = _mlp_ref(hs, params['el'])
    assert jnp.allclose(out['pred_ba'], ref_ba, atol=1e-1, rtol=1e-1)
    assert jnp.allclose(out['pred_az'], ref_az, atol=1e-1, rtol=1e-1)
    assert jnp.allclose(out['pred_el'], ref_el, atol=1e-1, rtol=1e-1)

    print("KERNEL_OK")
</pallas_src>

<mosaic_0001>
module attributes {stable_mosaic.version = 11 : i64} {
  func.func @_heads_kernel(%arg0: i32, %arg1: memref<16x32xbf16, #tpu.memory_space<vmem>>, %arg2: memref<32x256xbf16, #tpu.memory_space<vmem>>, %arg3: memref<2x256x256xbf16, #tpu.memory_space<vmem>>, %arg4: memref<256x128xbf16, #tpu.memory_space<vmem>>, %arg5: memref<4x256xf32, #tpu.memory_space<vmem>>, %arg6: memref<16x128xf32, #tpu.memory_space<vmem>>) attributes {dimension_semantics = [#tpu.dimension_semantics<parallel>], iteration_bounds = array<i64: 1>, scalar_prefetch = 0 : i64, scratch_operands = 0 : i64, tpu.core_type = #tpu.core_type<tc>, window_params = [{transform_indices = @transform_0, window_bounds = array<i64: 16, 32>}, {pipeline_mode = #tpu.pipeline_mode<synchronous>, transform_indices = @transform_1, window_bounds = array<i64: 32, 256>}, {pipeline_mode = #tpu.pipeline_mode<synchronous>, transform_indices = @transform_2, window_bounds = array<i64: 2, 256, 256>}, {pipeline_mode = #tpu.pipeline_mode<synchronous>, transform_indices = @transform_3, window_bounds = array<i64: 256, 128>}, {pipeline_mode = #tpu.pipeline_mode<synchronous>, transform_indices = @transform_4, window_bounds = array<i64: 4, 256>}, {transform_indices = @transform_5, window_bounds = array<i64: 16, 128>}]} {
    %c0 = arith.constant 0 : index
    %c0_0 = arith.constant 0 : index
    %0 = vector.load %arg1[%c0, %c0_0] : memref<16x32xbf16, #tpu.memory_space<vmem>>, vector<16x32xbf16>
    %c0_1 = arith.constant 0 : index
    %c0_2 = arith.constant 0 : index
    %1 = vector.load %arg2[%c0_1, %c0_2] : memref<32x256xbf16, #tpu.memory_space<vmem>>, vector<32x256xbf16>
    %cst = arith.constant dense<0.000000e+00> : vector<16x256xf32>
    %2 = tpu.matmul %0, %1, %cst {dimension_numbers = #tpu.dot_dimension_numbers<[1], [0], [0], [1], [0, 0, 1, 1], [], []>} : vector<16x32xbf16>, vector<32x256xbf16>, vector<16x256xf32> -> vector<16x256xf32>
    %c0_3 = arith.constant 0 : index
    %c0_4 = arith.constant 0 : index
    %3 = vector.load %arg5[%c0_3, %c0_4] : memref<4x256xf32, #tpu.memory_space<vmem>>, vector<1x256xf32>
    %4 = vector.broadcast %3 : vector<1x256xf32> to vector<16x256xf32>
    %5 = arith.addf %2, %4 : vector<16x256xf32>
    %6 = arith.negf %5 : vector<16x256xf32>
    %7 = math.exp %6 : vector<16x256xf32>
    %cst_5 = arith.constant 1.000000e+00 : f32
    %8 = vector.broadcast %cst_5 : f32 to vector<16x256xf32>
    %9 = arith.addf %8, %7 : vector<16x256xf32>
    %10 = arith.divf %8, %9 : vector<16x256xf32>
    %11 = arith.truncf %10 : vector<16x256xf32> to vector<16x256xbf16>
    %c0_6 = arith.constant 0 : index
    %c0_7 = arith.constant 0 : index
    %c0_8 = arith.constant 0 : index
    %12 = vector.load %arg3[%c0_6, %c0_7, %c0_8] : memref<2x256x256xbf16, #tpu.memory_space<vmem>>, vector<1x256x256xbf16>
    %13 = vector.shape_cast %12 : vector<1x256x256xbf16> to vector<256x256xbf16>
    %cst_9 = arith.constant dense<0.000000e+00> : vector<16x256xf32>
    %14 = tpu.matmul %11, %13, %cst_9 {dimension_numbers = #tpu.dot_dimension_numbers<[1], [0], [0], [1], [0, 0, 1, 1], [], []>} : vector<16x256xbf16>, vector<256x256xbf16>, vector<16x256xf32> -> vector<16x256xf32>
    %c1 = arith.constant 1 : index
    %c0_10 = arith.constant 0 : index
    %15 = vector.load %arg5[%c1, %c0_10] : memref<4x256xf32, #tpu.memory_space<vmem>>, vector<1x256xf32>
    %16 = vector.broadcast %15 : vector<1x256xf32> to vector<16x256xf32>
    %17 = arith.addf %14, %16 : vector<16x256xf32>
    %18 = arith.negf %17 : vector<16x256xf32>
    %19 = math.exp %18 : vector<16x256xf32>
    %cst_11 = arith.constant 1.000000e+00 : f32
    %20 = vector.broadcast %cst_11 : f32 to vector<16x256xf32>
    %21 = arith.addf %20, %19 : vector<16x256xf32>
    %22 = arith.divf %20, %21 : vector<16x256xf32>
    %23 = arith.truncf %22 : vector<16x256xf32> to vector<16x256xbf16>
    %c1_12 = arith.constant 1 : index
    %c0_13 = arith.constant 0 : index
    %c0_14 = arith.constant 0 : index
    %24 = vector.load %arg3[%c1_12, %c0_13, %c0_14] : memref<2x256x256xbf16, #tpu.memory_space<vmem>>, vector<1x256x256xbf16>
    %25 = vector.shape_cast %24 : vector<1x256x256xbf16> to vector<256x256xbf16>
    %cst_15 = arith.constant dense<0.000000e+00> : vector<16x256xf32>
    %26 = tpu.matmul %23, %25, %cst_15 {dimension_numbers = #tpu.dot_dimension_numbers<[1], [0], [0], [1], [0, 0, 1, 1], [], []>} : vector<16x256xbf16>, vector<256x256xbf16>, vector<16x256xf32> -> vector<16x256xf32>
    %c2 = arith.constant 2 : index
    %c0_16 = arith.constant 0 : index
    %27 = vector.load %arg5[%c2, %c0_16] : memref<4x256xf32, #tpu.memory_space<vmem>>, vector<1x256xf32>
    %28 = vector.broadcast %27 : vector<1x256xf32> to vector<16x256xf32>
    %29 = arith.addf %26, %28 : vector<16x256xf32>
    %30 = arith.negf %29 : vector<16x256xf32>
    %31 = math.exp %30 : vector<16x256xf32>
    %cst_17 = arith.constant 1.000000e+00 : f32
    %32 = vector.broadcast %cst_17 : f32 to vector<16x256xf32>
    %33 = arith.addf %32, %31 : vector<16x256xf32>
    %34 = arith.divf %32, %33 : vector<16x256xf32>
    %35 = arith.truncf %34 : vector<16x256xf32> to vector<16x256xbf16>
    %c0_18 = arith.constant 0 : index
    %c0_19 = arith.constant 0 : index
    %36 = vector.load %arg4[%c0_18, %c0_19] : memref<256x128xbf16, #tpu.memory_space<vmem>>, vector<256x128xbf16>
    %cst_20 = arith.constant dense<0.000000e+00> : vector<16x128xf32>
    %37 = tpu.matmul %35, %36, %cst_20 {dimension_numbers = #tpu.dot_dimension_numbers<[1], [0], [0], [1], [0, 0, 1, 1], [], []>} : vector<16x256xbf16>, vector<256x128xbf16>, vector<16x128xf32> -> vector<16x128xf32>
    %c3 = arith.constant 3 : index
    %c0_21 = arith.constant 0 : index
    %38 = vector.load %arg5[%c3, %c0_21] : memref<4x256xf32, #tpu.memory_space<vmem>>, vector<1x128xf32>
    %39 = vector.broadcast %38 : vector<1x128xf32> to vector<16x128xf32>
    %40 = arith.addf %37, %39 : vector<16x128xf32>
    %c0_22 = arith.constant 0 : index
    %c0_23 = arith.constant 0 : index
    %41 = vector.load %arg6[%c0_22, %c0_23] : memref<16x128xf32, #tpu.memory_space<vmem>>, vector<16x128xf32>
    tpu.vector_store %arg6[%c0_22, %c0_23], %40 {strides = array<i32>} : memref<16x128xf32, #tpu.memory_space<vmem>>, vector<16x128xf32>,
    return
  }
  func.func @transform_0(%arg0: i32) -> (i32, i32) {
    %c0_i32 = arith.constant 0 : i32
    %c0_i32_0 = arith.constant 0 : i32
    return %arg0, %c0_i32 : i32, i32
  }
  func.func @transform_1(%arg0: i32) -> (i32, i32) {
    %c0_i32 = arith.constant 0 : i32
    %c0_i32_0 = arith.constant 0 : i32
    %c0_i32_1 = arith.constant 0 : i32
    return %c0_i32, %c0_i32_0 : i32, i32
  }
  func.func @transform_2(%arg0: i32) -> (i32, i32, i32) {
    %c0_i32 = arith.constant 0 : i32
    %c0_i32_0 = arith.constant 0 : i32
    %c0_i32_1 = arith.constant 0 : i32
    %c0_i32_2 = arith.constant 0 : i32
    return %c0_i32, %c0_i32_0, %c0_i32_1 : i32, i32, i32
  }
  func.func @transform_3(%arg0: i32) -> (i32, i32) {
    %c0_i32 = arith.constant 0 : i32
    %c0_i32_0 = arith.constant 0 : i32
    %c0_i32_1 = arith.constant 0 : i32
    return %c0_i32, %c0_i32_0 : i32, i32
  }
  func.func @transform_4(%arg0: i32) -> (i32, i32) {
    %c0_i32 = arith.constant 0 : i32
    %c0_i32_0 = arith.constant 0 : i32
    %c0_i32_1 = arith.constant 0 : i32
    return %c0_i32, %c0_i32_0 : i32, i32
  }
  func.func @transform_5(%arg0: i32) -> (i32, i32) {
    %c0_i32 = arith.constant 0 : i32
    %c0_i32_0 = arith.constant 0 : i32
    return %arg0, %c0_i32 : i32, i32
  }
}

</mosaic_0001>

<llo_original>
// kernel: detection_azel_forward.1
$region0: #{detection_azel_forward.1}
  #allocation0 [shape = 'u32[]', space=smem, size = 0x4, offset = 0x4, fixed_abs, tag = 'smem constant byte address 0x4 - core index']
  #allocation1 [shape = 'u32[144,128]{1,0:T(1,128)}', space=vmem, size = 0x12000, scoped, tag = 'internal scratch']
  %s0 = inlined_call_operand.vmem [shape: bf16[16,32], index: 0, kind: input, shape index: {}]
  %s1 = inlined_call_operand.vmem [shape: bf16[32,256], index: 1, kind: input, shape index: {}]
  %s2 = inlined_call_operand.vmem [shape: bf16[2,256,256], index: 2, kind: input, shape index: {}]
  %s3 = inlined_call_operand.vmem [shape: bf16[256,128], index: 3, kind: input, shape index: {}]
  %s4 = inlined_call_operand.vmem [shape: f32[4,256], index: 4, kind: input, shape index: {}]
  %s5 = inlined_call_operand.vmem [shape: f32[16,128], index: 5, kind: output, shape index: {}]
  %s6 = sld [smem:[#allocation0]]
  $region30: #{detection_azel_forward.1} parent=0
    _
  %s8 = ssub.s32 1, %s6
  %s9 = scalar_select 0, %s8, %s6
  // Predicated region
  $region2: #{detection_azel_forward.1} parent=0 // pred_check
    _
  $region3: #{detection_azel_forward.1} parent=0 // pred_check_branch
    %11 = sbr.rel (0) target = $region5
  $region4: #{detection_azel_forward.1} parent=0 // pred_region
    _
  $region5: #{detection_azel_forward.1} parent=0 // pred_fallthru
    _
  // Predicated region
  $region6: #{detection_azel_forward.1} parent=0 // pred_check
    _
  $region7: #{detection_azel_forward.1} parent=0 // pred_check_branch
    %13 = sbr.rel (0) target = $region9
  $region8: #{detection_azel_forward.1} parent=0 // pred_region
    _
  $region9: #{detection_azel_forward.1} parent=0 // pred_fallthru
    _
  // Predicated region
  $region10: #{detection_azel_forward.1} parent=0 // pred_check
    _
  $region11: #{detection_azel_forward.1} parent=0 // pred_check_branch
    %15 = sbr.rel (0) target = $region13
  $region12: #{detection_azel_forward.1} parent=0 // pred_region
    _
  $region13: #{detection_azel_forward.1} parent=0 // pred_fallthru
    _
  // Predicated region
  $region14: #{detection_azel_forward.1} parent=0 // pred_check
    _
  $region15: #{detection_azel_forward.1} parent=0 // pred_check_branch
    %17 = sbr.rel (0) target = $region17
  $region16: #{detection_azel_forward.1} parent=0 // pred_region
    _
  $region17: #{detection_azel_forward.1} parent=0 // pred_fallthru
    _
  // Predicated region
  $region18: #{detection_azel_forward.1} parent=0 // pred_check
    _
  $region19: #{detection_azel_forward.1} parent=0 // pred_check_branch
    %19 = sbr.rel (0) target = $region21
  $region20: #{detection_azel_forward.1} parent=0 // pred_region
    _
  $region21: #{detection_azel_forward.1} parent=0 // pred_fallthru
    _
  %v21 = vld [vmem:[%s0] sm:$0xf]
  %v22 = vld [vmem:[%s0 + $0x4] sm:$0xf]
  %v23 = vld [vmem:[%s1] sm:$0xff]
  %v24 = vld [vmem:[%s1 + $0x8] sm:$0xff]
  %v25 = vld [vmem:[%s1 + $0x10] sm:$0xff]
  %v26 = vld [vmem:[%s1 + $0x18] sm:$0xff]
  %v27 = vld [vmem:[%s4] ss:$4 sm:$0x3]
  %v29 = vlaneseq
  %v30 = vshrl.u32 %v29, 7
  %v31 = vsub.s32 0, %v30
  %v32 = vrot.slane %v27, %v31
  %v33 = vlaneseq
  %v34 = vshrl.u32 %v33, 7
  %v35 = vsub.s32 1, %v34
  %v36 = vrot.slane %v27, %v35
  %v41 = vunpack.c.l.b16 %v21
  %v42 = vunpack.c.l.b16 %v22
  %v43 = vpack.c.b16 %v42, %v41
  %v48 = vunpack.c.l.b16 %v23
  %v49 = vunpack.c.h.b16 %v23
  %v50 = vunpack.c.l.b16 %v24
  %v51 = vunpack.c.h.b16 %v24
  %v52 = vunpack.c.l.b16 %v25
  %v53 = vunpack.c.h.b16 %v25
  %v54 = vunpack.c.l.b16 %v26
  %v55 = vunpack.c.h.b16 %v26
  %v56 = vpack.c.b16 %v50, %v48
  %v57 = vpack.c.b16 %v51, %v49
  %v58 = vpack.c.b16 %v54, %v52
  %v59 = vpack.c.b16 %v55, %v53
  %vm64 = vcmask 261120
  %v66 = vsel %vm64, %v43, 0
  %68 = vmatprep.subr.bf16.mxu0 0
  %69 = vmatpush1.bf16.msra.mxu0 0
  %70 = vmatprep.subr.bf16.mxu0 0
  %71 = vmatpush1.bf16.msra.mxu0 0
  %72 = vmatprep.subr.bf16.mxu0 0
  %73 = vmatpush1.bf16.msra.mxu0 0
  %74 = vmatprep.subr.bf16.mxu0 0
  %75 = vmatpush1.bf16.msra.mxu0 0
  %76 = vmatprep.subr.bf16.mxu0 0
  %77 = vmatpush1.bf16.msra.mxu0 0
  %78 = vmatprep.subr.bf16.mxu0 0
  %79 = vmatpush1.bf16.msra.mxu0 0
  %80 = vmatprep.subr.bf16.mxu0 %v59
  %81 = vmatpush1.bf16.msra.mxu0 %v58
  %82 = vmatprep.subr.bf16.mxu0 %v57
  %83 = vmatpush1.bf16.msra.mxu0 %v56
  %84 = vmatprep.subr.bf16.mxu0 0
  %85 = vmatpush2.bf16.msra.mxu0 0
  %86 = vmatprep.subr.bf16.mxu0 0
  %87 = vmatpush2.bf16.msra.mxu0 0
  %88 = vmatprep.subr.bf16.mxu0 0
  %89 = vmatpush2.bf16.msra.mxu0 0
  %90 = vmatprep.subr.bf16.mxu0 0
  %91 = vmatpush2.bf16.msra.mxu0 0
  %92 = vmatprep.subr.bf16.mxu0 0
  %93 = vmatpush2.bf16.msra.mxu0 0
  %94 = vmatprep.subr.bf16.mxu0 0
  %95 = vmatpush2.bf16.msra.mxu0 0
  %96 = vmatprep.subr.bf16.mxu0 0
  %97 = vmatpush2.bf16.msra.mxu0 0
  %98 = vmatprep.subr.bf16.mxu0 0
  %99 = vmatpush2.bf16.msra.mxu0 0
  %100 = vmatprep.mubr.bf16.mxu0 0
  %101 = vmatmul.mubr.bf16.gmra.mxu0 %v66
  %v102 = vpop.f32.mrf.mxu0
  %v103 = vadd.f32 %v32, %v102
  %v104 = vpop.f32.mrf.mxu0
  %v105 = vadd.f32 %v36, %v104
  %v106 = vpop.f32.mrf.mxu0
  %v107 = vadd.f32 %v32, %v106
  %v108 = vpop.f32.mrf.mxu0
  %v109 = vadd.f32 %v36, %v108
  %110 = vdwg.mxu0
  %v111 = vxor.u32 %v103, 2147483648
  %v112 = vxor.u32 %v105, 2147483648
  %v113 = vxor.u32 %v107, 2147483648
  %v114 = vxor.u32 %v109, 2147483648
  %v115 = vmul.f32 %v111, 1.442695
  %v116 = vpow.pop %v115
  %v117 = vmul.f32 %v112, 1.442695
  %v118 = vpow.pop %v117
  %v119 = vmul.f32 %v113, 1.442695
  %v120 = vpow.pop %v119
  %v121 = vmul.f32 %v114, 1.442695
  %v122 = vpow.pop %v121
  %v123 = vadd.f32 %v116, 1.0
  %v124 = vadd.f32 %v118, 1.0
  %v125 = vadd.f32 %v120, 1.0
  %v126 = vadd.f32 %v122, 1.0
  %v127 = vrcp.pop %v123
  %v128 = vmul.f32 1.0, %v127
  %v129 = vrcp.pop %v124
  %v130 = vmul.f32 1.0, %v129
  %v131 = vrcp.pop %v125
  %v132 = vmul.f32 1.0, %v131
  %v133 = vrcp.pop %v126
  %v134 = vmul.f32 1.0, %v133
  %v135 = vpack.c.bf16 %v132, %v128
  %v136 = vpack.c.bf16 %v134, %v130
  %v137 = vld [vmem:[%s2] sm:$0xff]
  %v138 = vld [vmem:[%s2 + $0x8] sm:$0xff]
  %v139 = vld [vmem:[%s2 + $0x10] sm:$0xff]
  %v140 = vld [vmem:[%s2 + $0x18] sm:$0xff]
  %v141 = vld [vmem:[%s2 + $0x20] sm:$0xff]
  %v142 = vld [vmem:[%s2 + $0x28] sm:$0xff]
  %v143 = vld [vmem:[%s2 + $0x30] sm:$0xff]
  %v144 = vld [vmem:[%s2 + $0x38] sm:$0xff]
  %v145 = vld [vmem:[%s2 + $0x40] sm:$0xff]
  %v146 = vld [vmem:[%s2 + $0x48] sm:$0xff]
  %v147 = vld [vmem:[%s2 + $0x50] sm:$0xff]
  %v148 = vld [vmem:[%s2 + $0x58] sm:$0xff]
  %v149 = vld [vmem:[%s2 + $0x60] sm:$0xff]
  %v150 = vld [vmem:[%s2 + $0x68] sm:$0xff]
  %v151 = vld [vmem:[%s2 + $0x70] sm:$0xff]
  %v152 = vld [vmem:[%s2 + $0x78] sm:$0xff]
  %v153 = vld [vmem:[%s2 + $0x80] sm:$0xff]
  %v154 = vld [vmem:[%s2 + $0x88] sm:$0xff]
  %v155 = vld [vmem:[%s2 + $0x90] sm:$0xff]
  %v156 = vld [vmem:[%s2 + $0x98] sm:$0xff]
  %v157 = vld [vmem:[%s2 + $0xa0] sm:$0xff]
  %v158 = vld [vmem:[%s2 + $0xa8] sm:$0xff]
  %v159 = vld [vmem:[%s2 + $0xb0] sm:$0xff]
  %v160 = vld [vmem:[%s2 + $0xb8] sm:$0xff]
  %v161 = vld [vmem:[%s2 + $0xc0] sm:$0xff]
  %v162 = vld [vmem:[%s2 + $0xc8] sm:$0xff]
  %v163 = vld [vmem:[%s2 + $0xd0] sm:$0xff]
  %v164 = vld [vmem:[%s2 + $0xd8] sm:$0xff]
  %v165 = vld [vmem:[%s2 + $0xe0] sm:$0xff]
  %v166 = vld [vmem:[%s2 + $0xe8] sm:$0xff]
  %v167 = vld [vmem:[%s2 + $0xf0] sm:$0xff]
  %v168 = vld [vmem:[%s2 + $0xf8] sm:$0xff]
  %s169 = scalar_lea.vmem %s4, 1
  %v170 = vld [vmem:[%s169] ss:$4 sm:$0x3]
  %v172 = vlaneseq
  %v173 = vshrl.u32 %v172, 7
  %v174 = vsub.s32 0, %v173
  %v175 = vrot.slane %v170, %v174
  %v176 = vlaneseq
  %v177 = vshrl.u32 %v176, 7
  %v178 = vsub.s32 1, %v177
  %v179 = vrot.slane %v170, %v178
  %v214 = vunpack.c.l.b16 %v137
  %v215 = vunpack.c.h.b16 %v137
  %v216 = vunpack.c.l.b16 %v138
  %v217 = vunpack.c.h.b16 %v138
  %v218 = vunpack.c.l.b16 %v139
  %v219 = vunpack.c.h.b16 %v139
  %v220 = vunpack.c.l.b16 %v140
  %v221 = vunpack.c.h.b16 %v140
  %v222 = vunpack.c.l.b16 %v141
  %v223 = vunpack.c.h.b16 %v141
  %v224 = vunpack.c.l.b16 %v142
  %v225 = vunpack.c.h.b16 %v142
  %v226 = vunpack.c.l.b16 %v143
  %v227 = vunpack.c.h.b16 %v143
  %v228 = vunpack.c.l.b16 %v144
  %v229 = vunpack.c.h.b16 %v144
  %v230 = vunpack.c.l.b16 %v145
  %v231 = vunpack.c.h.b16 %v145
  %v232 = vunpack.c.l.b16 %v146
  %v233 = vunpack.c.h.b16 %v146
  %v234 = vunpack.c.l.b16 %v147
  %v235 = vunpack.c.h.b16 %v147
  %v236 = vunpack.c.l.b16 %v148
  %v237 = vunpack.c.h.b16 %v148
  %v238 = vunpack.c.l.b16 %v149
  %v239 = vunpack.c.h.b16 %v149
  %v240 = vunpack.c.l.b16 %v150
  %v241 = vunpack.c.h.b16 %v150
  %v242 = vunpack.c.l.b16 %v151
  %v243 = vunpack.c.h.b16 %v151
  %v244 = vunpack.c.l.b16 %v152
  %v245 = vunpack.c.h.b16 %v152
  %v246 = vunpack.c.l.b16 %v153
  %v247 = vunpack.c.h.b16 %v153
  %v248 = vunpack.c.l.b16 %v154
  %v249 = vunpack.c.h.b16 %v154
  %v250 = vunpack.c.l.b16 %v155
  %v251 = vunpack.c.h.b16 %v155
  %v252 = vunpack.c.l.b16 %v156
  %v253 = vunpack.c.h.b16 %v156
  %v254 = vunpack.c.l.b16 %v157
  %v255 = vunpack.c.h.b16 %v157
  %v256 = vunpack.c.l.b16 %v158
  %v257 = vunpack.c.h.b16 %v158
  %v258 = vunpack.c.l.b16 %v159
  %v259 = vunpack.c.h.b16 %v159
  %v260 = vunpack.c.l.b16 %v160
  %v261 = vunpack.c.h.b16 %v160
  %v262 = vunpack.c.l.b16 %v161
  %v263 = vunpack.c.h.b16 %v161
  %v264 = vunpack.c.l.b16 %v162
  %v265 = vunpack.c.h.b16 %v162
  %v266 = vunpack.c.l.b16 %v163
  %v267 = vunpack.c.h.b16 %v163
  %v268 = vunpack.c.l.b16 %v164
  %v269 = vunpack.c.h.b16 %v164
  %v270 = vunpack.c.l.b16 %v165
  %v271 = vunpack.c.h.b16 %v165
  %v272 = vunpack.c.l.b16 %v166
  %v273 = vunpack.c.h.b16 %v166
  %v274 = vunpack.c.l.b16 %v167
  %v275 = vunpack.c.h.b16 %v167
  %v276 = vunpack.c.l.b16 %v168
  %v277 = vunpack.c.h.b16 %v168
  %v278 = vpack.c.b16 %v216, %v214
  %v279 = vpack.c.b16 %v217, %v215
  %v280 = vpack.c.b16 %v220, %v218
  %v281 = vpack.c.b16 %v221, %v219
  %v282 = vpack.c.b16 %v224, %v222
  %v283 = vpack.c.b16 %v225, %v223
  %v284 = vpack.c.b16 %v228, %v226
  %v285 = vpack.c.b16 %v229, %v227
  %v286 = vpack.c.b16 %v232, %v230
  %v287 = vpack.c.b16 %v233, %v231
  %v288 = vpack.c.b16 %v236, %v234
  %v289 = vpack.c.b16 %v237, %v235
  %v290 = vpack.c.b16 %v240, %v238
  %v291 = vpack.c.b16 %v241, %v239
  %v292 = vpack.c.b16 %v244, %v242
  %v293 = vpack.c.b16 %v245, %v243
  %v294 = vpack.c.b16 %v248, %v246
  %v295 = vpack.c.b16 %v249, %v247
  %v296 = vpack.c.b16 %v252, %v250
  %v297 = vpack.c.b16 %v253, %v251
  %v298 = vpack.c.b16 %v256, %v254
  %v299 = vpack.c.b16 %v257, %v255
  %v300 = vpack.c.b16 %v260, %v258
  %v301 = vpack.c.b16 %v261, %v259
  %v302 = vpack.c.b16 %v264, %v262
  %v303 = vpack.c.b16 %v265, %v263
  %v304 = vpack.c.b16 %v268, %v266
  %v305 = vpack.c.b16 %v269, %v267
  %v306 = vpack.c.b16 %v272, %v270
  %v307 = vpack.c.b16 %v273, %v271
  %v308 = vpack.c.b16 %v276, %v274
  %v309 = vpack.c.b16 %v277, %v275
  %342 = vmatprep.subr.bf16.mxu0 %v293
  %343 = vmatpush1.bf16.msra.mxu0 %v292
  %344 = vmatprep.subr.bf16.mxu0 %v291
  %345 = vmatpush1.bf16.msra.mxu0 %v290
  %346 = vmatprep.subr.bf16.mxu0 %v289
  %347 = vmatpush1.bf16.msra.mxu0 %v288
  %348 = vmatprep.subr.bf16.mxu0 %v287
  %349 = vmatpush1.bf16.msra.mxu0 %v286
  %350 = vmatprep.subr.bf16.mxu0 %v285
  %351 = vmatpush1.bf16.msra.mxu0 %v284
  %352 = vmatprep.subr.bf16.mxu0 %v283
  %353 = vmatpush1.bf16.msra.mxu0 %v282
  %354 = vmatprep.subr.bf16.mxu0 %v281
  %355 = vmatpush1.bf16.msra.mxu0 %v280
  %356 = vmatprep.subr.bf16.mxu0 %v279
  %357 = vmatpush1.bf16.msra.mxu0 %v278
  %358 = vmatprep.subr.bf16.mxu0 %v309
  %359 = vmatpush2.bf16.msra.mxu0 %v308
  %360 = vmatprep.subr.bf16.mxu0 %v307
  %361 = vmatpush2.bf16.msra.mxu0 %v306
  %362 = vmatprep.subr.bf16.mxu0 %v305
  %363 = vmatpush2.bf16.msra.mxu0 %v304
  %364 = vmatprep.subr.bf16.mxu0 %v303
  %365 = vmatpush2.bf16.msra.mxu0 %v302
  %366 = vmatprep.subr.bf16.mxu0 %v301
  %367 = vmatpush2.bf16.msra.mxu0 %v300
  %368 = vmatprep.subr.bf16.mxu0 %v299
  %369 = vmatpush2.bf16.msra.mxu0 %v298
  %370 = vmatprep.subr.bf16.mxu0 %v297
  %371 = vmatpush2.bf16.msra.mxu0 %v296
  %372 = vmatprep.subr.bf16.mxu0 %v295
  %373 = vmatpush2.bf16.msra.mxu0 %v294
  %374 = vmatprep.mubr.bf16.mxu0 %v136
  %375 = vmatmul.mubr.bf16.gmra.mxu0 %v135
  %v376 = vpop.f32.mrf.mxu0
  %v377 = vadd.f32 %v175, %v376
  %v378 = vpop.f32.mrf.mxu0
  %v379 = vadd.f32 %v179, %v378
  %v380 = vpop.f32.mrf.mxu0
  %v381 = vadd.f32 %v175, %v380
  %v382 = vpop.f32.mrf.mxu0
  %v383 = vadd.f32 %v179, %v382
  %384 = vdwg.mxu0
  %v385 = vxor.u32 %v377, 2147483648
  %v386 = vxor.u32 %v379, 2147483648
  %v387 = vxor.u32 %v381, 2147483648
  %v388 = vxor.u32 %v383, 2147483648
  %v389 = vmul.f32 %v385, 1.442695
  %v390 = vpow.pop %v389
  %v391 = vmul.f32 %v386, 1.442695
  %v392 = vpow.pop %v391
  %v393 = vmul.f32 %v387, 1.442695
  %v394 = vpow.pop %v393
  %v395 = vmul.f32 %v388, 1.442695
  %v396 = vpow.pop %v395
  %v397 = vadd.f32 %v390, 1.0
  %v398 = vadd.f32 %v392, 1.0
  %v399 = vadd.f32 %v394, 1.0
  %v400 = vadd.f32 %v396, 1.0
  %v401 = vrcp.pop %v397
  %v402 = vmul.f32 1.0, %v401
  %v403 = vrcp.pop %v398
  %v404 = vmul.f32 1.0, %v403
  %v405 = vrcp.pop %v399
  %v406 = vmul.f32 1.0, %v405
  %v407 = vrcp.pop %v400
  %v408 = vmul.f32 1.0, %v407
  %v409 = vpack.c.bf16 %v406, %v402
  %v410 = vpack.c.bf16 %v408, %v404
  %s411 = scalar_lea.vmem %s2, 256
  %v412 = vld [vmem:[%s411] sm:$0xff]
  %v413 = vld [vmem:[%s411 + $0x8] sm:$0xff]
  %v414 = vld [vmem:[%s411 + $0x10] sm:$0xff]
  %v415 = vld [vmem:[%s411 + $0x18] sm:$0xff]
  %v416 = vld [vmem:[%s411 + $0x20] sm:$0xff]
  %v417 = vld [vmem:[%s411 + $0x28] sm:$0xff]
  %v418 = vld [vmem:[%s411 + $0x30] sm:$0xff]
  %v419 = vld [vmem:[%s411 + $0x38] sm:$0xff]
  %v420 = vld [vmem:[%s411 + $0x40] sm:$0xff]
  %v421 = vld [vmem:[%s411 + $0x48] sm:$0xff]
  %v422 = vld [vmem:[%s411 + $0x50] sm:$0xff]
  %v423 = vld [vmem:[%s411 + $0x58] sm:$0xff]
  %v424 = vld [vmem:[%s411 + $0x60] sm:$0xff]
  %v425 = vld [vmem:[%s411 + $0x68] sm:$0xff]
  %v426 = vld [vmem:[%s411 + $0x70] sm:$0xff]
  %v427 = vld [vmem:[%s411 + $0x78] sm:$0xff]
  %v428 = vld [vmem:[%s411 + $0x80] sm:$0xff]
  %v429 = vld [vmem:[%s411 + $0x88] sm:$0xff]
  %v430 = vld [vmem:[%s411 + $0x90] sm:$0xff]
  %v431 = vld [vmem:[%s411 + $0x98] sm:$0xff]
  %v432 = vld [vmem:[%s411 + $0xa0] sm:$0xff]
  %v433 = vld [vmem:[%s411 + $0xa8] sm:$0xff]
  %v434 = vld [vmem:[%s411 + $0xb0] sm:$0xff]
  %v435 = vld [vmem:[%s411 + $0xb8] sm:$0xff]
  %v436 = vld [vmem:[%s411 + $0xc0] sm:$0xff]
  %v437 = vld [vmem:[%s411 + $0xc8] sm:$0xff]
  %v438 = vld [vmem:[%s411 + $0xd0] sm:$0xff]
  %v439 = vld [vmem:[%s411 + $0xd8] sm:$0xff]
  %v440 = vld [vmem:[%s411 + $0xe0] sm:$0xff]
  %v441 = vld [vmem:[%s411 + $0xe8] sm:$0xff]
  %v442 = vld [vmem:[%s411 + $0xf0] sm:$0xff]
  %v443 = vld [vmem:[%s411 + $0xf8] sm:$0xff]
  %s444 = scalar_lea.vmem %s4, 2
  %v445 = vld [vmem:[%s444] ss:$4 sm:$0x3]
  %v447 = vlaneseq
  %v448 = vshrl.u32 %v447, 7
  %v449 = vsub.s32 0, %v448
  %v450 = vrot.slane %v445, %v449
  %v451 = vlaneseq
  %v452 = vshrl.u32 %v451, 7
  %v453 = vsub.s32 1, %v452
  %v454 = vrot.slane %v445, %v453
  %v489 = vunpack.c.l.b16 %v412
  %v490 = vunpack.c.h.b16 %v412
  %v491 = vunpack.c.l.b16 %v413
  %v492 = vunpack.c.h.b16 %v413
  %v493 = vunpack.c.l.b16 %v414
  %v494 = vunpack.c.h.b16 %v414
  %v495 = vunpack.c.l.b16 %v415
  %v496 = vunpack.c.h.b16 %v415
  %v497 = vunpack.c.l.b16 %v416
  %v498 = vunpack.c.h.b16 %v416
  %v499 = vunpack.c.l.b16 %v417
  %v500 = vunpack.c.h.b16 %v417
  %v501 = vunpack.c.l.b16 %v418
  %v502 = vunpack.c.h.b16 %v418
  %v503 = vunpack.c.l.b16 %v419
  %v504 = vunpack.c.h.b16 %v419
  %v505 = vunpack.c.l.b16 %v420
  %v506 = vunpack.c.h.b16 %v420
  %v507 = vunpack.c.l.b16 %v421
  %v508 = vunpack.c.h.b16 %v421
  %v509 = vunpack.c.l.b16 %v422
  %v510 = vunpack.c.h.b16 %v422
  %v511 = vunpack.c.l.b16 %v423
  %v512 = vunpack.c.h.b16 %v423
  %v513 = vunpack.c.l.b16 %v424
  %v514 = vunpack.c.h.b16 %v424
  %v515 = vunpack.c.l.b16 %v425
  %v516 = vunpack.c.h.b16 %v425
  %v517 = vunpack.c.l.b16 %v426
  %v518 = vunpack.c.h.b16 %v426
  %v519 = vunpack.c.l.b16 %v427
  %v520 = vunpack.c.h.b16 %v427
  %v521 = vunpack.c.l.b16 %v428
  %v522 = vunpack.c.h.b16 %v428
  %v523 = vunpack.c.l.b16 %v429
  %v524 = vunpack.c.h.b16 %v429
  %v525 = vunpack.c.l.b16 %v430
  %v526 = vunpack.c.h.b16 %v430
  %v527 = vunpack.c.l.b16 %v431
  %v528 = vunpack.c.h.b16 %v431
  %v529 = vunpack.c.l.b16 %v432
  %v530 = vunpack.c.h.b16 %v432
  %v531 = vunpack.c.l.b16 %v433
  %v532 = vunpack.c.h.b16 %v433
  %v533 = vunpack.c.l.b16 %v434
  %v534 = vunpack.c.h.b16 %v434
  %v535 = vunpack.c.l.b16 %v435
  %v536 = vunpack.c.h.b16 %v435
  %v537 = vunpack.c.l.b16 %v436
  %v538 = vunpack.c.h.b16 %v436
  %v539 = vunpack.c.l.b16 %v437
  %v540 = vunpack.c.h.b16 %v437
  %v541 = vunpack.c.l.b16 %v438
  %v542 = vunpack.c.h.b16 %v438
  %v543 = vunpack.c.l.b16 %v439
  %v544 = vunpack.c.h.b16 %v439
  %v545 = vunpack.c.l.b16 %v440
  %v546 = vunpack.c.h.b16 %v440
  %v547 = vunpack.c.l.b16 %v441
  %v548 = vunpack.c.h.b16 %v441
  %v549 = vunpack.c.l.b16 %v442
  %v550 = vunpack.c.h.b16 %v442
  %v551 = vunpack.c.l.b16 %v443
  %v552 = vunpack.c.h.b16 %v443
  %v553 = vpack.c.b16 %v491, %v489
  %v554 = vpack.c.b16 %v492, %v490
  %v555 = vpack.c.b16 %v495, %v493
  %v556 = vpack.c.b16 %v496, %v494
  %v557 = vpack.c.b16 %v499, %v497
  %v558 = vpack.c.b16 %v500, %v498
  %v559 = vpack.c.b16 %v503, %v501
  %v560 = vpack.c.b16 %v504, %v502
  %v561 = vpack.c.b16 %v507, %v505
  %v562 = vpack.c.b16 %v508, %v506
  %v563 = vpack.c.b16 %v511, %v509
  %v564 = vpack.c.b16 %v512, %v510
  %v565 = vpack.c.b16 %v515, %v513
  %v566 = vpack.c.b16 %v516, %v514
  %v567 = vpack.c.b16 %v519, %v517
  %v568 = vpack.c.b16 %v520, %v518
  %v569 = vpack.c.b16 %v523, %v521
  %v570 = vpack.c.b16 %v524, %v522
  %v571 = vpack.c.b16 %v527, %v525
  %v572 = vpack.c.b16 %v528, %v526
  %v573 = vpack.c.b16 %v531, %v529
  %v574 = vpack.c.b16 %v532, %v530
  %v575 = vpack.c.b16 %v535, %v533
  %v576 = vpack.c.b16 %v536, %v534
  %v577 = vpack.c.b16 %v539, %v537
  %v578 = vpack.c.b16 %v540, %v538
  %v579 = vpack.c.b16 %v543, %v541
  %v580 = vpack.c.b16 %v544, %v542
  %v581 = vpack.c.b16 %v547, %v545
  %v582 = vpack.c.b16 %v548, %v546
  %v583 = vpack.c.b16 %v551, %v549
  %v584 = vpack.c.b16 %v552, %v550
  %617 = vmatprep.subr.bf16.mxu0 %v568
  %618 = vmatpush1.bf16.msra.mxu0 %v567
  %619 = vmatprep.subr.bf16.mxu0 %v566
  %620 = vmatpush1.bf16.msra.mxu0 %v565
  %621 = vmatprep.subr.bf16.mxu0 %v564
  %622 = vmatpush1.bf16.msra.mxu0 %v563
  %623 = vmatprep.subr.bf16.mxu0 %v562
  %624 = vmatpush1.bf16.msra.mxu0 %v561
  %625 = vmatprep.subr.bf16.mxu0 %v560
  %626 = vmatpush1.bf16.msra.mxu0 %v559
  %627 = vmatprep.subr.bf16.mxu0 %v558
  %628 = vmatpush1.bf16.msra.mxu0 %v557
  %629 = vmatprep.subr.bf16.mxu0 %v556
  %630 = vmatpush1.bf16.msra.mxu0 %v555
  %631 = vmatprep.subr.bf16.mxu0 %v554
  %632 = vmatpush1.bf16.msra.mxu0 %v553
  %633 = vmatprep.subr.bf16.mxu0 %v584
  %634 = vmatpush2.bf16.msra.mxu0 %v583
  %635 = vmatprep.subr.bf16.mxu0 %v582
  %636 = vmatpush2.bf16.msra.mxu0 %v581
  %637 = vmatprep.subr.bf16.mxu0 %v580
  %638 = vmatpush2.bf16.msra.mxu0 %v579
  %639 = vmatprep.subr.bf16.mxu0 %v578
  %640 = vmatpush2.bf16.msra.mxu0 %v577
  %641 = vmatprep.subr.bf16.mxu0 %v576
  %642 = vmatpush2.bf16.msra.mxu0 %v575
  %643 = vmatprep.subr.bf16.mxu0 %v574
  %644 = vmatpush2.bf16.msra.mxu0 %v573
  %645 = vmatprep.subr.bf16.mxu0 %v572
  %646 = vmatpush2.bf16.msra.mxu0 %v571
  %647 = vmatprep.subr.bf16.mxu0 %v570
  %648 = vmatpush2.bf16.msra.mxu0 %v569
  %649 = vmatprep.mubr.bf16.mxu0 %v410
  %650 = vmatmul.mubr.bf16.gmra.mxu0 %v409
  %v651 = vpop.f32.mrf.mxu0
  %v652 = vadd.f32 %v450, %v651
  %v653 = vpop.f32.mrf.mxu0
  %v654 = vadd.f32 %v454, %v653
  %v655 = vpop.f32.mrf.mxu0
  %v656 = vadd.f32 %v450, %v655
  %v657 = vpop.f32.mrf.mxu0
  %v658 = vadd.f32 %v454, %v657
  %659 = vdwg.mxu0
  %v660 = vxor.u32 %v652, 2147483648
  %v661 = vxor.u32 %v654, 2147483648
  %v662 = vxor.u32 %v656, 2147483648
  %v663 = vxor.u32 %v658, 2147483648
  %v664 = vmul.f32 %v660, 1.442695
  %v665 = vpow.pop %v664
  %v666 = vmul.f32 %v661, 1.442695
  %v667 = vpow.pop %v666
  %v668 = vmul.f32 %v662, 1.442695
  %v669 = vpow.pop %v668
  %v670 = vmul.f32 %v663, 1.442695
  %v671 = vpow.pop %v670
  %v672 = vadd.f32 %v665, 1.0
  %v673 = vadd.f32 %v667, 1.0
  %v674 = vadd.f32 %v669, 1.0
  %v675 = vadd.f32 %v671, 1.0
  %v676 = vrcp.pop %v672
  %v677 = vmul.f32 1.0, %v676
  %v678 = vrcp.pop %v673
  %v679 = vmul.f32 1.0, %v678
  %v680 = vrcp.pop %v674
  %v681 = vmul.f32 1.0, %v680
  %v682 = vrcp.pop %v675
  %v683 = vmul.f32 1.0, %v682
  %v684 = vpack.c.bf16 %v681, %v677
  %v685 = vpack.c.bf16 %v683, %v679
  %v686 = vld [vmem:[%s3] sm:$0xf]
  %v687 = vld [vmem:[%s3 + $0x4] sm:$0xf]
  %v688 = vld [vmem:[%s3 + $0x8] sm:$0xf]
  %v689 = vld [vmem:[%s3 + $0xc] sm:$0xf]
  %v690 = vld [vmem:[%s3 + $0x10] sm:$0xf]
  %v691 = vld [vmem:[%s3 + $0x14] sm:$0xf]
  %v692 = vld [vmem:[%s3 + $0x18] sm:$0xf]
  %v693 = vld [vmem:[%s3 + $0x1c] sm:$0xf]
  %v694 = vld [vmem:[%s3 + $0x20] sm:$0xf]
  %v695 = vld [vmem:[%s3 + $0x24] sm:$0xf]
  %v696 = vld [vmem:[%s3 + $0x28] sm:$0xf]
  %v697 = vld [vmem:[%s3 + $0x2c] sm:$0xf]
  %v698 = vld [vmem:[%s3 + $0x30] sm:$0xf]
  %v699 = vld [vmem:[%s3 + $0x34] sm:$0xf]
  %v700 = vld [vmem:[%s3 + $0x38] sm:$0xf]
  %v701 = vld [vmem:[%s3 + $0x3c] sm:$0xf]
  %v702 = vld [vmem:[%s3 + $0x40] sm:$0xf]
  %v703 = vld [vmem:[%s3 + $0x44] sm:$0xf]
  %v704 = vld [vmem:[%s3 + $0x48] sm:$0xf]
  %v705 = vld [vmem:[%s3 + $0x4c] sm:$0xf]
  %v706 = vld [vmem:[%s3 + $0x50] sm:$0xf]
  %v707 = vld [vmem:[%s3 + $0x54] sm:$0xf]
  %v708 = vld [vmem:[%s3 + $0x58] sm:$0xf]
  %v709 = vld [vmem:[%s3 + $0x5c] sm:$0xf]
  %v710 = vld [vmem:[%s3 + $0x60] sm:$0xf]
  %v711 = vld [vmem:[%s3 + $0x64] sm:$0xf]
  %v712 = vld [vmem:[%s3 + $0x68] sm:$0xf]
  %v713 = vld [vmem:[%s3 + $0x6c] sm:$0xf]
  %v714 = vld [vmem:[%s3 + $0x70] sm:$0xf]
  %v715 = vld [vmem:[%s3 + $0x74] sm:$0xf]
  %v716 = vld [vmem:[%s3 + $0x78] sm:$0xf]
  %v717 = vld [vmem:[%s3 + $0x7c] sm:$0xf]
  %v718 = vld [vmem:[%s4 + $0x3] sm:$0x1]
  %v719 = vlaneseq
  %v720 = vshrl.u32 %v719, 7
  %v721 = vsub.s32 0, %v720
  %v722 = vrot.slane %v718, %v721
  %v755 = vunpack.c.l.b16 %v686
  %v756 = vunpack.c.l.b16 %v687
  %v757 = vunpack.c.l.b16 %v688
  %v758 = vunpack.c.l.b16 %v689
  %v759 = vunpack.c.l.b16 %v690
  %v760 = vunpack.c.l.b16 %v691
  %v761 = vunpack.c.l.b16 %v692
  %v762 = vunpack.c.l.b16 %v693
  %v763 = vunpack.c.l.b16 %v694
  %v764 = vunpack.c.l.b16 %v695
  %v765 = vunpack.c.l.b16 %v696
  %v766 = vunpack.c.l.b16 %v697
  %v767 = vunpack.c.l.b16 %v698
  %v768 = vunpack.c.l.b16 %v699
  %v769 = vunpack.c.l.b16 %v700
  %v770 = vunpack.c.l.b16 %v701
  %v771 = vunpack.c.l.b16 %v702
  %v772 = vunpack.c.l.b16 %v703
  %v773 = vunpack.c.l.b16 %v704
  %v774 = vunpack.c.l.b16 %v705
  %v775 = vunpack.c.l.b16 %v706
  %v776 = vunpack.c.l.b16 %v707
  %v777 = vunpack.c.l.b16 %v708
  %v778 = vunpack.c.l.b16 %v709
  %v779 = vunpack.c.l.b16 %v710
  %v780 = vunpack.c.l.b16 %v711
  %v781 = vunpack.c.l.b16 %v712
  %v782 = vunpack.c.l.b16 %v713
  %v783 = vunpack.c.l.b16 %v714
  %v784 = vunpack.c.l.b16 %v715
  %v785 = vunpack.c.l.b16 %v716
  %v786 = vunpack.c.l.b16 %v717
  %v787 = vpack.c.b16 %v756, %v755
  %v788 = vpack.c.b16 %v758, %v757
  %v789 = vpack.c.b16 %v760, %v759
  %v790 = vpack.c.b16 %v762, %v761
  %v791 = vpack.c.b16 %v764, %v763
  %v792 = vpack.c.b16 %v766, %v765
  %v793 = vpack.c.b16 %v768, %v767
  %v794 = vpack.c.b16 %v770, %v769
  %v795 = vpack.c.b16 %v772, %v771
  %v796 = vpack.c.b16 %v774, %v773
  %v797 = vpack.c.b16 %v776, %v775
  %v798 = vpack.c.b16 %v778, %v777
  %v799 = vpack.c.b16 %v780, %v779
  %v800 = vpack.c.b16 %v782, %v781
  %v801 = vpack.c.b16 %v784, %v783
  %v802 = vpack.c.b16 %v786, %v785
  %819 = vmatprep.subr.bf16.mxu0 0
  %820 = vmatpush1.bf16.msra.mxu0 %v794
  %821 = vmatprep.subr.bf16.mxu0 0
  %822 = vmatpush1.bf16.msra.mxu0 %v793
  %823 = vmatprep.subr.bf16.mxu0 0
  %824 = vmatpush1.bf16.msra.mxu0 %v792
  %825 = vmatprep.subr.bf16.mxu0 0
  %826 = vmatpush1.bf16.msra.mxu0 %v791
  %827 = vmatprep.subr.bf16.mxu0 0
  %828 = vmatpush1.bf16.msra.mxu0 %v790
  %829 = vmatprep.subr.bf16.mxu0 0
  %830 = vmatpush1.bf16.msra.mxu0 %v789
  %831 = vmatprep.subr.bf16.mxu0 0
  %832 = vmatpush1.bf16.msra.mxu0 %v788
  %833 = vmatprep.subr.bf16.mxu0 0
  %834 = vmatpush1.bf16.msra.mxu0 %v787
  %835 = vmatprep.subr.bf16.mxu0 0
  %836 = vmatpush2.bf16.msra.mxu0 %v802
  %837 = vmatprep.subr.bf16.mxu0 0
  %838 = vmatpush2.bf16.msra.mxu0 %v801
  %839 = vmatprep.subr.bf16.mxu0 0
  %840 = vmatpush2.bf16.msra.mxu0 %v800
  %841 = vmatprep.subr.bf16.mxu0 0
  %842 = vmatpush2.bf16.msra.mxu0 %v799
  %843 = vmatprep.subr.bf16.mxu0 0
  %844 = vmatpush2.bf16.msra.mxu0 %v798
  %845 = vmatprep.subr.bf16.mxu0 0
  %846 = vmatpush2.bf16.msra.mxu0 %v797
  %847 = vmatprep.subr.bf16.mxu0 0
  %848 = vmatpush2.bf16.msra.mxu0 %v796
  %849 = vmatprep.subr.bf16.mxu0 0
  %850 = vmatpush2.bf16.msra.mxu0 %v795
  %851 = vmatprep.mubr.bf16.mxu0 %v685
  %852 = vmatmul.mubr.bf16.gmra.mxu0 %v684
  %v853 = vpop.f32.mrf.mxu0
  %v854 = vadd.f32 %v722, %v853
  %v855 = vpop.f32.mrf.mxu0
  %v856 = vpop.f32.mrf.mxu0
  %v857 = vadd.f32 %v722, %v856
  %v858 = vpop.f32.mrf.mxu0
  %859 = vdwg.mxu0
  %860 = vst [vmem:[%s5] sm:$0xff] %v854
  %861 = vst [vmem:[%s5 + $0x8] sm:$0xff] %v857
  // Predicated region
  $region22: #{detection_azel_forward.1} parent=0 // pred_check
    _
  $region23: #{detection_azel_forward.1} parent=0 // pred_check_branch
    %863 = sbr.rel (0) target = $region25
  $region24: #{detection_azel_forward.1} parent=0 // pred_region
    _
  $region25: #{detection_azel_forward.1} parent=0 // pred_fallthru
    _
  // Predicated region
  $region26: #{detection_azel_forward.1} parent=0 // pred_check
    _
  $region27: #{detection_azel_forward.1} parent=0 // pred_check_branch
    %865 = sbr.rel (0) target = $region29
  $region28: #{detection_azel_forward.1} parent=0 // pred_region
    _
  $region29: #{detection_azel_forward.1} parent=0 // pred_fallthru
    _

</llo_original>
